<compile_context>
chip_gen: v5e
topology: v5e:2x2
jax: 0.10.0
libtpu: 0.0.40
codegen_flags: <defaults>
</compile_context>

<pallas_src>
import math

import jax
import jax.numpy as jnp
from jax.experimental import pallas as pl
from jax.experimental.pallas import tpu as pltpu

_LANE = 128      # vreg lane width (last dim)
_SUBLANE = 8     # vreg sublane count for 32-bit dtypes (second-to-last dim)

# Per-block byte budget for the streamed x / out tiles.  ~1-4 MiB amortizes the
# ~0.35 us per-grid-step overhead (measured ~85% HBM roofline regime) while the
# double-buffered working set 2 * (x_blk + out_blk + bias_blk) stays ~8-9 MiB,
# well under the default scoped VMEM on every generation, so no
# vmem_limit_bytes override is required.
_DEFAULT_BLOCK_BYTES = 2 * 1024 * 1024

# Inputs at or below this total size run as a single resident block (no grid).
_SMALL_INPUT_BYTES = 2 * 1024 * 1024


def _bias_kernel(x_ref, b_ref, o_ref):
    # Pure VPU elementwise add; b_ref broadcasts against x_ref over the leading
    # (batch) axis:  2D path (tb,tk)+(1,tk);  3D path (B,tr,C)+(tr,C).
    o_ref[...] = x_ref[...] + b_ref[...]


def _round_down(v, m):
    return (v // m) * m


def _cost(B, K, itemsize):
    return pl.CostEstimate(
        flops=B * K,
        transcendentals=0,
        bytes_accessed=(2 * B * K + K) * itemsize,
    )


def _bias_small(x2, b2, B, K, itemsize, donate_x):
    # Tiny input: single block, whole arrays resident in VMEM (grid=()).
    kwargs = {}
    if donate_x:
        kwargs["input_output_aliases"] = {0: 0}
    return pl.pallas_call(
        _bias_kernel,
        out_shape=jax.ShapeDtypeStruct((B, K), x2.dtype),
        cost_estimate=_cost(B, K, itemsize),
        **kwargs,
    )(x2, b2)


def _bias_tiled_2d(x2, b2, B, K, itemsize, sub, block_bytes, donate_x):
    # Lane tile: full K if an 8-sublane block fits the budget, otherwise the
    # largest multiple of 128 that does (ragged last tile via cdiv + masking).
    if K <= _LANE or K * sub * itemsize <= block_bytes:
        tk = K
    else:
        tk = max(_LANE, _round_down(block_bytes // (sub * itemsize), _LANE))
        tk = min(tk, _round_down(K, _LANE))

    # Sublane tile: multiple of `sub` filling the remaining budget, or full B.
    tb = _round_down(block_bytes // (tk * itemsize), sub)
    tb = max(tb, sub)
    if tb >= B:
        tb = B

    nk = pl.cdiv(K, tk)
    nb = pl.cdiv(B, tb)

    kwargs = {}
    if donate_x:
        kwargs["input_output_aliases"] = {0: 0}

    return pl.pallas_call(
        _bias_kernel,
        out_shape=jax.ShapeDtypeStruct((B, K), x2.dtype),
        grid_spec=pltpu.PrefetchScalarGridSpec(
            num_scalar_prefetch=0,
            # Batch-tile axis innermost: the bias block index is constant along
            # it, so the bias tile stays VMEM-resident (no re-DMA per step).
            grid=(nk, nb),
            in_specs=[
                pl.BlockSpec((tb, tk), lambda k, b: (b, k)),  # x slab tile
                pl.BlockSpec((1, tk), lambda k, b: (0, k)),   # bias row tile
            ],
            out_specs=pl.BlockSpec((tb, tk), lambda k, b: (b, k)),
        ),
        compiler_params=pltpu.CompilerParams(
            dimension_semantics=("parallel", "arbitrary"),
        ),
        cost_estimate=_cost(B, K, itemsize),
        **kwargs,
    )(x2, b2)


def _bias_tiled_3d(x3, b3, B, R, C, itemsize, sub, block_bytes, donate_x):
    # Small batch (B < sublane count): keep the whole batch in the leading block
    # dim and tile the row axis R in sublane-aligned chunks so every (tr, C)
    # slice fills vregs (lane- and sublane-dense loads/stores).
    tr = _round_down(block_bytes // (B * C * itemsize), sub)
    tr = max(tr, sub)
    if tr >= R:
        tr = R
    nr = pl.cdiv(R, tr)
    K = R * C

    kwargs = {}
    if donate_x:
        kwargs["input_output_aliases"] = {0: 0}

    return pl.pallas_call(
        _bias_kernel,
        out_shape=jax.ShapeDtypeStruct((B, R, C), x3.dtype),
        grid_spec=pltpu.PrefetchScalarGridSpec(
            num_scalar_prefetch=0,
            grid=(nr,),
            in_specs=[
                pl.BlockSpec((B, tr, C), lambda r: (0, r, 0)),  # x tile
                pl.BlockSpec((tr, C), lambda r: (r, 0)),        # bias tile
            ],
            out_specs=pl.BlockSpec((B, tr, C), lambda r: (0, r, 0)),
        ),
        compiler_params=pltpu.CompilerParams(
            dimension_semantics=("parallel",),
        ),
        cost_estimate=_cost(B, K, itemsize),
        **kwargs,
    )(x3, b3)


def bias_forward(x, bias, *, donate_x=False,
                 block_bytes=_DEFAULT_BLOCK_BYTES,
                 small_input_bytes=_SMALL_INPUT_BYTES):
    """Pallas TPU equivalent of BiasLayer.forward: x + bias[None, ...]."""
    assert bias.shape == x.shape[1:], (x.shape, bias.shape)
    if bias.dtype != x.dtype:
        # Keep compute in the input dtype (avoids silent jnp promotion).
        bias = bias.astype(x.dtype)

    B = x.shape[0]
    K = int(math.prod(x.shape[1:]))
    if B == 0 or K == 0:
        return x
    itemsize = jnp.dtype(x.dtype).itemsize
    # Packed sub-32-bit dtypes want a larger sublane multiple (16 for bf16, ...).
    sub = _SUBLANE * max(1, 4 // itemsize)
    total_bytes = B * K * itemsize

    # Fast path: tiny inputs -> single resident block, no pipeline overhead.
    if total_bytes <= small_input_bytes:
        out2 = _bias_small(x.reshape(B, K), bias.reshape(1, K),
                           B, K, itemsize, donate_x)
        return out2.reshape(x.shape)

    # Small batch + lane-aligned features: 3-D sublane-dense layout.
    if B < sub and K % _LANE == 0:
        C = _LANE
        R = K // C
        out3 = _bias_tiled_3d(x.reshape(B, R, C), bias.reshape(R, C),
                              B, R, C, itemsize, sub, block_bytes, donate_x)
        return out3.reshape(x.shape)

    # General case: 2-D slab tiled along both batch and feature axes.
    out2 = _bias_tiled_2d(x.reshape(B, K), bias.reshape(1, K),
                          B, K, itemsize, sub, block_bytes, donate_x)
    return out2.reshape(x.shape)


if __name__ == "__main__":
    keys = jax.random.split(jax.random.PRNGKey(0), 6)

    def check(x, bias, **kw):
        out = jax.block_until_ready(bias_forward(x, bias, **kw))
        ref = x + bias[None, ...]
        assert out.shape == x.shape, (out.shape, x.shape)
        assert out.dtype == x.dtype, (out.dtype, x.dtype)
        assert jnp.allclose(out, ref, atol=1e-6, rtol=1e-6), "mismatch vs reference"

    # 1) The module's nominal small example -> single-block fast path.
    x = jax.random.normal(keys[0], (2, 4, 16, 16), dtype=jnp.float32)
    b = jax.random.normal(keys[1], (4, 16, 16), dtype=jnp.float32)
    check(x, b)

    # 2) 2-D tiled path (batch >= 8): small block budget forces lane tiling,
    #    batch tiling, and a ragged (masked) last batch block.  Grid = (2, 3).
    x = jax.random.normal(keys[2], (20, 8, 16, 16), dtype=jnp.float32)  # K = 2048
    b = jax.random.normal(keys[3], (8, 16, 16), dtype=jnp.float32)
    check(x, b, small_input_bytes=0, block_bytes=32 * 1024)

    # 3) 3-D tiled path (batch < 8, lane-aligned K): sublane-dense row tiles
    #    with a ragged last row tile.  Grid = (3,).
    x = jax.random.normal(keys[4], (2, 20, 128), dtype=jnp.float32)     # K = 2560
    b = jax.random.normal(keys[5], (20, 128), dtype=jnp.float32)
    check(x, b, small_input_bytes=0, block_bytes=8 * 1024)

    print("KERNEL_OK")
</pallas_src>

<mosaic_0001>
module attributes {stable_mosaic.version = 11 : i64} {
  func.func @_bias_kernel(%arg0: memref<2x1024xf32, #tpu.memory_space<vmem>>, %arg1: memref<1x1024xf32, #tpu.memory_space<vmem>>, %arg2: memref<2x1024xf32, #tpu.memory_space<vmem>>) attributes {dimension_semantics = [], scalar_prefetch = 0 : i64, scratch_operands = 0 : i64, tpu.core_type = #tpu.core_type<tc>} {
    %c0 = arith.constant 0 : index
    %c0_0 = arith.constant 0 : index
    %0 = vector.load %arg0[%c0, %c0_0] : memref<2x1024xf32, #tpu.memory_space<vmem>>, vector<2x1024xf32>
    %c0_1 = arith.constant 0 : index
    %c0_2 = arith.constant 0 : index
    %1 = vector.load %arg1[%c0_1, %c0_2] : memref<1x1024xf32, #tpu.memory_space<vmem>>, vector<1x1024xf32>
    %2 = vector.broadcast %1 : vector<1x1024xf32> to vector<2x1024xf32>
    %3 = arith.addf %0, %2 : vector<2x1024xf32>
    %c0_3 = arith.constant 0 : index
    %c0_4 = arith.constant 0 : index
    %4 = vector.load %arg2[%c0_3, %c0_4] : memref<2x1024xf32, #tpu.memory_space<vmem>>, vector<2x1024xf32>
    tpu.vector_store %arg2[%c0_3, %c0_4], %3 {strides = array<i32>} : memref<2x1024xf32, #tpu.memory_space<vmem>>, vector<2x1024xf32>,
    return
  }
}

</mosaic_0001>

<llo_original>
// kernel: tpu_custom_call.1
$region0: #{tpu_custom_call.1}
  #allocation0 [shape = 'u32[]', space=smem, size = 0x4, offset = 0x4, fixed_abs, tag = 'smem constant byte address 0x4 - core index']
  #allocation1 [shape = 'u32[72,128]{1,0:T(1,128)}', space=vmem, size = 0x9000, scoped, tag = 'internal scratch']
  %s0 = inlined_call_operand.hbm [shape: f32[2,1024], index: 0, kind: input, shape index: {}]
  %s1 = inlined_call_operand.hbm [shape: f32[1,1024], index: 1, kind: input, shape index: {}]
  %s2 = inlined_call_operand.hbm [shape: f32[2,1024], index: 2, kind: output, shape index: {}]
  %s3 = sld [smem:[#allocation0]]
  $region26: #{tpu_custom_call.1} parent=0
    _
  %s5 = ssub.s32 1, %s3
  %s6 = scalar_select 0, %s5, %s3
  $region1: #{tpu_custom_call.1} parent=0
    #allocation2 [shape = 'u8[8192]{0}', space=vmem, size = 0x2000, scoped, tag = 'input window, operand 0, single buffered']
    #allocation3 [shape = 's32[1]{0}', space=sflag, size = 0x4, scoped, tag = 'scoped memory for tpu_custom_call.1']
    #allocation4 [shape = 's32[1]{0}', space=sflag, size = 0x4, scoped, tag = 'scoped memory for tpu_custom_call.1']
    #allocation5 [shape = 'u8[4096]{0}', space=vmem, size = 0x1000, scoped, tag = 'input window, operand 1, single buffered']
    #allocation6 [shape = 's32[1]{0}', space=sflag, size = 0x4, scoped, tag = 'scoped memory for tpu_custom_call.1']
    #allocation7 [shape = 'u8[8192]{0}', space=vmem, size = 0x2000, scoped, tag = 'output window, operand 0, single buffered']
    %7 = vsyncpa [#allocation3], 0
    %8 = vsyncpa [#allocation6], 0
    %9 = vsyncpa [#allocation4], 0
    // Predicated region
    $region2: #{tpu_custom_call.1} parent=1 // pred_check
      _
    $region3: #{tpu_custom_call.1} parent=1 // pred_check_branch
      %11 = sbr.rel (0) target = $region5
    $region4: #{tpu_custom_call.1} parent=1 // pred_region
      %13 = vsyncadd [#allocation3], 0
      %s15 = sshll.u32 %s0, 4
      %s16 = int_to_ptr.hbm [resolvable:$true] %s15
      %s17 = sshll.u32 [#allocation2], 4
      %s18 = int_to_ptr.vmem [resolvable:$true] %s17
      %20 = dma.hbm_to_vmem [thread:$0]  %s16, 256, %s18, [#allocation3]
    $region5: #{tpu_custom_call.1} parent=1 // pred_fallthru
      _
    // Predicated region
    $region6: #{tpu_custom_call.1} parent=1 // pred_check
      _
    $region7: #{tpu_custom_call.1} parent=1 // pred_check_branch
      %22 = sbr.rel (0) target = $region9
    $region8: #{tpu_custom_call.1} parent=1 // pred_region
      %24 = vsyncadd [#allocation6], 0
      %s26 = sshll.u32 %s1, 4
      %s27 = int_to_ptr.hbm [resolvable:$true] %s26
      %s28 = sshll.u32 [#allocation5], 4
      %s29 = int_to_ptr.vmem [resolvable:$true] %s28
      %31 = dma.hbm_to_vmem [thread:$0]  %s27, 128, %s29, [#allocation6]
    $region9: #{tpu_custom_call.1} parent=1 // pred_fallthru
      _
    // Predicated region
    $region10: #{tpu_custom_call.1} parent=1 // pred_check
      _
    $region11: #{tpu_custom_call.1} parent=1 // pred_check_branch
      %33 = sbr.rel (0) target = $region13
    $region12: #{tpu_custom_call.1} parent=1 // pred_region
      %35 = dma.done [#allocation3], 256
    $region13: #{tpu_custom_call.1} parent=1 // pred_fallthru
      _
    // Predicated region
    $region14: #{tpu_custom_call.1} parent=1 // pred_check
      _
    $region15: #{tpu_custom_call.1} parent=1 // pred_check_branch
      %37 = sbr.rel (0) target = $region17
    $region16: #{tpu_custom_call.1} parent=1 // pred_region
      %39 = dma.done [#allocation6], 128
    $region17: #{tpu_custom_call.1} parent=1 // pred_fallthru
      _
    %v40 = vld [vmem:[#allocation2] sm:$0xff]
    %v41 = vld [vmem:[#allocation2 + $0x8] sm:$0xff]
    %v42 = vld [vmem:[#allocation5] sm:$0xff]
    %v44 = vperm.slane %v42, 0
    %v45 = vperm.slane %v42, 1
    %v46 = vperm.slane %v42, 2
    %v47 = vperm.slane %v42, 3
    %v48 = vperm.slane %v42, 4
    %v49 = vperm.slane %v42, 5
    %v50 = vperm.slane %v42, 6
    %v51 = vperm.slane %v42, 7
    %v52 = vrot.slane %v45, 6
    %v53 = vrot.slane %v46, 4
    %v54 = vrot.slane %v47, 2
    %v55 = vrot.slane %v49, 6
    %v56 = vrot.slane %v50, 4
    %v57 = vrot.slane %v51, 2
    %vm58 = vcmask 1041408
    %v59 = vsel %vm58, %v44, %v52
    %vm60 = vcmask 1045508
    %v61 = vsel %vm60, %v53, %v54
    %vm62 = vcmask 1043456
    %v63 = vsel %vm62, %v59, %v61
    %v64 = vsel %vm58, %v48, %v55
    %v65 = vsel %vm60, %v56, %v57
    %v66 = vsel %vm62, %v64, %v65
    %v69 = vadd.f32 %v40, %v63
    %v70 = vadd.f32 %v41, %v66
    %71 = vst [vmem:[#allocation7] sm:$0xff] %v69
    %72 = vst [vmem:[#allocation7 + $0x8] sm:$0xff] %v70
    // Predicated region
    $region18: #{tpu_custom_call.1} parent=1 // pred_check
      _
    $region19: #{tpu_custom_call.1} parent=1 // pred_check_branch
      %74 = sbr.rel (0) target = $region21
    $region20: #{tpu_custom_call.1} parent=1 // pred_region
      %76 = vsyncadd [#allocation4], 0
      %s78 = sshll.u32 [#allocation7], 4
      %s79 = int_to_ptr.vmem [resolvable:$true] %s78
      %s80 = sshll.u32 %s2, 4
      %s81 = int_to_ptr.hbm [resolvable:$true] %s80
      %83 = dma.vmem_to_hbm [thread:$0]  %s79, 256, %s81, [#allocation4]
    $region21: #{tpu_custom_call.1} parent=1 // pred_fallthru
      _
    // Predicated region
    $region22: #{tpu_custom_call.1} parent=1 // pred_check
      _
    $region23: #{tpu_custom_call.1} parent=1 // pred_check_branch
      %85 = sbr.rel (0) target = $region25
    $region24: #{tpu_custom_call.1} parent=1 // pred_region
      %87 = dma.done [#allocation4], 256
    $region25: #{tpu_custom_call.1} parent=1 // pred_fallthru
      _
    %88 = vsyncpa [#allocation3], 1
    %89 = vsyncpa [#allocation6], 1
    %90 = vsyncpa [#allocation4], 1

</llo_original>
